<compile_context>
chip_gen: v6e
topology: v6e:2x2x1
jax: 0.10.0
libtpu: 0.0.40
codegen_flags: <defaults>
</compile_context>

<pallas_src>
import math

import jax
import jax.numpy as jnp
from jax.experimental import pallas as pl
from jax.experimental.pallas import tpu as pltpu

DELTA_T = 0.01               # self.delta_t
SQRT_DT = math.sqrt(DELTA_T)
MAX_LANE_TILE = 2048         # lanes per block when N is large (multiple of 128)


# ----------------------------------------------------------------------------
# Single-step kernel (matches the torch forward exactly: one EM update)
# ----------------------------------------------------------------------------
def _maruyama_step_kernel(t_ref, x_ref, rp_ref, rv_ref, out_ref):
    """One Euler–Maruyama step, fully elementwise on the VPU.

    t_ref:   (1, 1)       current time, resident in SMEM (scalar path)
    x_ref:   (dim, tile)  current state tile
    rp_ref:  (dim, 1)     per-dimension diffusion coefficient
    rv_ref:  (dim, tile)  standard-normal draws
    out_ref: (dim, tile)  updated state tile (aliased onto x's HBM buffer)
    """
    t = t_ref[0, 0]                       # scalar from SMEM
    scale = 1.0 - t * DELTA_T             # x + (-x*t)*dt  ==  x * (1 - t*dt)
    rp_scaled = rp_ref[...] * SQRT_DT     # (dim, 1), cheap
    out_ref[...] = x_ref[...] * scale + rp_scaled * rv_ref[...]


def maruyama_forward(std_input, dim=None):
    """Mirrors maruyama.forward: unpack std_input, run rand_f (the kernel),
    then torch.cat(...).resize_(dim, N) — an identity reshape here."""
    curr_t = std_input[0].astype(jnp.float32).reshape(1, 1)  # (1, 1) scalar time
    curr_x = std_input[1]                                    # (dim, N)
    rand_para = std_input[3]                                 # (dim, 1)
    random_value = std_input[6]                              # (dim, N)

    if dim is None:
        dim = curr_x.shape[0]
    n = curr_x.shape[1]

    # Full-width block when it fits (single grid step); otherwise big lane
    # tiles. A partial last block (n % tile != 0) is handled by Pallas padding,
    # harmless for this elementwise op.
    lane_tile = n if n <= MAX_LANE_TILE else MAX_LANE_TILE
    grid = (pl.cdiv(n, lane_tile),)

    out = pl.pallas_call(
        _maruyama_step_kernel,
        out_shape=jax.ShapeDtypeStruct((dim, n), curr_x.dtype),
        grid_spec=pltpu.PrefetchScalarGridSpec(
            num_scalar_prefetch=0,
            grid=grid,
            in_specs=[
                pl.BlockSpec(memory_space=pltpu.MemorySpace.SMEM),   # curr_t
                pl.BlockSpec((dim, lane_tile), lambda j: (0, j)),    # curr_x
                pl.BlockSpec((dim, 1), lambda j: (0, 0)),            # rand_para
                pl.BlockSpec((dim, lane_tile), lambda j: (0, j)),    # random_value
            ],
            out_specs=pl.BlockSpec((dim, lane_tile), lambda j: (0, j)),
        ),
        # Elementwise, same tiling in/out -> in-place safe: reuse curr_x's buffer.
        input_output_aliases={1: 0},
        compiler_params=pltpu.CompilerParams(
            dimension_semantics=("parallel",)
        ),
    )(curr_t, curr_x, rand_para, random_value)

    # torch.cat(rand_f(...)).resize_(dim, len(curr_x[0])) -> identity reshape.
    return out.reshape(dim, n)


# ----------------------------------------------------------------------------
# Fused multi-step rollout kernel: state stays resident in VMEM across steps;
# HBM traffic is one read of x0 + streaming noise + one final write of x.
# ----------------------------------------------------------------------------
def _maruyama_rollout_kernel(t_ref, x0_ref, rp_ref, rv_ref, out_ref, x_sc):
    """Grid axis = time step (arbitrary). x_sc is the VMEM-resident state.

    t_ref:   (1, 1)        base time t0, in SMEM
    x0_ref:  (dim, N)      initial state
    rp_ref:  (dim, 1)      diffusion coefficient
    rv_ref:  (1, dim, N)   this step's standard-normal draws
    out_ref: (dim, N)      final state (written once, at the last step)
    x_sc:    (dim, N) f32  VMEM scratch holding the evolving state
    """
    k = pl.program_id(0)

    @pl.when(k == 0)
    def _():
        x_sc[...] = x0_ref[...]

    t = t_ref[0, 0] + DELTA_T * k.astype(jnp.float32)
    scale = 1.0 - t * DELTA_T
    x_sc[...] = x_sc[...] * scale + (rp_ref[...] * SQRT_DT) * rv_ref[0]

    @pl.when(k == pl.num_programs(0) - 1)
    def _():
        out_ref[...] = x_sc[...]


def maruyama_rollout(curr_t, curr_x, rand_para, random_values):
    """Apply `steps` Euler–Maruyama updates in one pallas_call.

    random_values: (steps, dim, N) — per-step standard-normal draws.
    Returns the state after the last step, shape (dim, N).
    """
    steps, dim, n = random_values.shape
    t0 = curr_t.astype(jnp.float32).reshape(1, 1)

    return pl.pallas_call(
        _maruyama_rollout_kernel,
        out_shape=jax.ShapeDtypeStruct((dim, n), curr_x.dtype),
        grid_spec=pltpu.PrefetchScalarGridSpec(
            num_scalar_prefetch=0,
            grid=(steps,),
            in_specs=[
                pl.BlockSpec(memory_space=pltpu.MemorySpace.SMEM),   # t0
                pl.BlockSpec((dim, n), lambda k: (0, 0)),            # x0
                pl.BlockSpec((dim, 1), lambda k: (0, 0)),            # rand_para
                pl.BlockSpec((1, dim, n), lambda k: (k, 0, 0)),      # rv[k]
            ],
            out_specs=pl.BlockSpec((dim, n), lambda k: (0, 0)),
            scratch_shapes=[pltpu.VMEM((dim, n), jnp.float32)],
        ),
        compiler_params=pltpu.CompilerParams(
            dimension_semantics=("arbitrary",)   # state carried across steps
        ),
    )(t0, curr_x, rand_para, random_values)


# ----------------------------------------------------------------------------
# Pure-JAX references
# ----------------------------------------------------------------------------
def _reference_step(curr_t, curr_x, rand_para, random_value):
    t = curr_t.reshape(())
    drift = -curr_x * t
    return curr_x + drift * DELTA_T + rand_para * random_value * SQRT_DT


def _reference_rollout(curr_t, curr_x, rand_para, random_values):
    t0 = float(curr_t.reshape(()))
    x = curr_x
    for k in range(random_values.shape[0]):
        t = t0 + k * DELTA_T
        x = x + (-x * t) * DELTA_T + rand_para * random_values[k] * SQRT_DT
    return x


if __name__ == "__main__":
    DIM = 8
    N = 512
    STEPS = 16

    key = jax.random.PRNGKey(0)
    k_x, k_rp, k_rv, k_rvs = jax.random.split(key, 4)

    curr_t = jnp.full((1, 1), 0.5, dtype=jnp.float32)
    curr_x = jax.random.normal(k_x, (DIM, N), dtype=jnp.float32)
    rand_para = jax.random.uniform(k_rp, (DIM, 1), dtype=jnp.float32)
    random_value = jax.random.normal(k_rv, (DIM, N), dtype=jnp.float32)
    random_values = jax.random.normal(k_rvs, (STEPS, DIM, N), dtype=jnp.float32)

    # std_input layout matches the torch forward's indexing (indices 2, 4, 5
    # are unused by forward; filled with placeholders).
    std_input = (
        curr_t,                              # [0] curr_t
        curr_x,                              # [1] curr_x
        jnp.zeros((1,), jnp.float32),        # [2] unused
        rand_para,                           # [3] rand_para
        jnp.zeros((1,), jnp.float32),        # [4] unused
        jnp.zeros((1,), jnp.float32),        # [5] unused
        random_value,                        # [6] random_value
    )

    # Compute references before the kernel calls (the single-step kernel
    # donates curr_x's buffer via input_output_aliases).
    ref_step = _reference_step(curr_t, curr_x, rand_para, random_value)
    ref_roll = _reference_rollout(curr_t, curr_x, rand_para, random_values)

    # Fused multi-step rollout (uses curr_x, so run it before the donating call).
    out_roll = jax.block_until_ready(
        maruyama_rollout(curr_t, curr_x, rand_para, random_values))
    assert out_roll.shape == (DIM, N)
    assert jnp.allclose(out_roll, ref_roll, atol=1e-5, rtol=1e-5)

    # Single step == the torch module's forward.
    out_step = jax.block_until_ready(maruyama_forward(std_input, dim=DIM))
    assert out_step.shape == (DIM, N)
    assert jnp.allclose(out_step, ref_step, atol=1e-5, rtol=1e-5)

    print("KERNEL_OK")
</pallas_src>

<mosaic_0001>
module attributes {stable_mosaic.version = 11 : i64} {
  func.func @_maruyama_rollout_kernel(%arg0: i32, %arg1: memref<1x1xf32, #tpu.memory_space<smem>>, %arg2: memref<8x512xf32, #tpu.memory_space<vmem>>, %arg3: memref<8x1xf32, #tpu.memory_space<vmem>>, %arg4: memref<1x8x512xf32, #tpu.memory_space<vmem>>, %arg5: memref<8x512xf32, #tpu.memory_space<vmem>>, %arg6: memref<8x512xf32, #tpu.memory_space<vmem>>) attributes {dimension_semantics = [#tpu.dimension_semantics<arbitrary>], iteration_bounds = array<i64: 16>, scalar_prefetch = 0 : i64, scratch_operands = 1 : i64, tpu.core_type = #tpu.core_type<tc>, window_params = [{transform_indices = @transform_0, window_bounds = array<i64: 1, 1>}, {pipeline_mode = #tpu.pipeline_mode<synchronous>, transform_indices = @transform_1, window_bounds = array<i64: 8, 512>}, {pipeline_mode = #tpu.pipeline_mode<synchronous>, transform_indices = @transform_2, window_bounds = array<i64: 8, 1>}, {transform_indices = @transform_3, window_bounds = array<i64: 1, 8, 512>}, {pipeline_mode = #tpu.pipeline_mode<synchronous>, transform_indices = @transform_4, window_bounds = array<i64: 8, 512>}]} {
    %c0_i32 = arith.constant 0 : i32
    %0 = arith.cmpi eq, %arg0, %c0_i32 : i32
    %1 = arith.extui %0 : i1 to i32
    %c0_i32_0 = arith.constant 0 : i32
    %2 = arith.cmpi ne, %1, %c0_i32_0 : i32
    scf.if %2 {
      %c0_15 = arith.constant 0 : index
      %c0_16 = arith.constant 0 : index
      %24 = vector.load %arg2[%c0_15, %c0_16] : memref<8x512xf32, #tpu.memory_space<vmem>>, vector<8x512xf32>
      %c0_17 = arith.constant 0 : index
      %c0_18 = arith.constant 0 : index
      %25 = vector.load %arg6[%c0_17, %c0_18] : memref<8x512xf32, #tpu.memory_space<vmem>>, vector<8x512xf32>
      tpu.vector_store %arg6[%c0_17, %c0_18], %24 {strides = array<i32>} : memref<8x512xf32, #tpu.memory_space<vmem>>, vector<8x512xf32>,
    } else {
    }
    %c0 = arith.constant 0 : index
    %c0_1 = arith.constant 0 : index
    %3 = memref.load %arg1[%c0, %c0_1] : memref<1x1xf32, #tpu.memory_space<smem>>
    %4 = arith.sitofp %arg0 : i32 to f32
    %cst = arith.constant 0.00999999977 : f32
    %5 = arith.mulf %cst, %4 : f32
    %6 = arith.addf %3, %5 : f32
    %cst_2 = arith.constant 0.00999999977 : f32
    %7 = arith.mulf %6, %cst_2 : f32
    %cst_3 = arith.constant 1.000000e+00 : f32
    %8 = arith.subf %cst_3, %7 : f32
    %c0_4 = arith.constant 0 : index
    %c0_5 = arith.constant 0 : index
    %9 = vector.load %arg6[%c0_4, %c0_5] : memref<8x512xf32, #tpu.memory_space<vmem>>, vector<8x512xf32>
    %10 = vector.broadcast %8 : f32 to vector<8x512xf32>
    %11 = arith.mulf %9, %10 : vector<8x512xf32>
    %c0_6 = arith.constant 0 : index
    %c0_7 = arith.constant 0 : index
    %12 = vector.load %arg3[%c0_6, %c0_7] : memref<8x1xf32, #tpu.memory_space<vmem>>, vector<8x1xf32>
    %cst_8 = arith.constant 1.000000e-01 : f32
    %13 = vector.broadcast %cst_8 : f32 to vector<8x1xf32>
    %14 = arith.mulf %12, %13 : vector<8x1xf32>
    %c0_9 = arith.constant 0 : index
    %c0_10 = arith.constant 0 : index
    %c0_11 = arith.constant 0 : index
    %15 = vector.load %arg4[%c0_9, %c0_10, %c0_11] : memref<1x8x512xf32, #tpu.memory_space<vmem>>, vector<1x8x512xf32>
    %16 = vector.shape_cast %15 : vector<1x8x512xf32> to vector<8x512xf32>
    %17 = vector.broadcast %14 : vector<8x1xf32> to vector<8x512xf32>
    %18 = arith.mulf %17, %16 : vector<8x512xf32>
    %19 = arith.addf %11, %18 : vector<8x512xf32>
    %c0_12 = arith.constant 0 : index
    %c0_13 = arith.constant 0 : index
    %20 = vector.load %arg6[%c0_12, %c0_13] : memref<8x512xf32, #tpu.memory_space<vmem>>, vector<8x512xf32>
    tpu.vector_store %arg6[%c0_12, %c0_13], %19 {strides = array<i32>} : memref<8x512xf32, #tpu.memory_space<vmem>>, vector<8x512xf32>,
    %c15_i32 = arith.constant 15 : i32
    %21 = arith.cmpi eq, %arg0, %c15_i32 : i32
    %22 = arith.extui %21 : i1 to i32
    %c0_i32_14 = arith.constant 0 : i32
    %23 = arith.cmpi ne, %22, %c0_i32_14 : i32
    scf.if %23 {
      %c0_15 = arith.constant 0 : index
      %c0_16 = arith.constant 0 : index
      %24 = vector.load %arg6[%c0_15, %c0_16] : memref<8x512xf32, #tpu.memory_space<vmem>>, vector<8x512xf32>
      %c0_17 = arith.constant 0 : index
      %c0_18 = arith.constant 0 : index
      %25 = vector.load %arg5[%c0_17, %c0_18] : memref<8x512xf32, #tpu.memory_space<vmem>>, vector<8x512xf32>
      tpu.vector_store %arg5[%c0_17, %c0_18], %24 {strides = array<i32>} : memref<8x512xf32, #tpu.memory_space<vmem>>, vector<8x512xf32>,
    } else {
    }
    return
  }
  func.func @transform_0(%arg0: i32) -> (i32, i32) {
    %c0_i32 = arith.constant 0 : i32
    %c0_i32_0 = arith.constant 0 : i32
    %c0_i32_1 = arith.constant 0 : i32
    return %c0_i32, %c0_i32_0 : i32, i32
  }
  func.func @transform_1(%arg0: i32) -> (i32, i32) {
    %c0_i32 = arith.constant 0 : i32
    %c0_i32_0 = arith.constant 0 : i32
    %c0_i32_1 = arith.constant 0 : i32
    return %c0_i32, %c0_i32_0 : i32, i32
  }
  func.func @transform_2(%arg0: i32) -> (i32, i32) {
    %c0_i32 = arith.constant 0 : i32
    %c0_i32_0 = arith.constant 0 : i32
    %c0_i32_1 = arith.constant 0 : i32
    return %c0_i32, %c0_i32_0 : i32, i32
  }
  func.func @transform_3(%arg0: i32) -> (i32, i32, i32) {
    %c0_i32 = arith.constant 0 : i32
    %c0_i32_0 = arith.constant 0 : i32
    %c0_i32_1 = arith.constant 0 : i32
    return %arg0, %c0_i32, %c0_i32_0 : i32, i32, i32
  }
  func.func @transform_4(%arg0: i32) -> (i32, i32) {
    %c0_i32 = arith.constant 0 : i32
    %c0_i32_0 = arith.constant 0 : i32
    %c0_i32_1 = arith.constant 0 : i32
    return %c0_i32, %c0_i32_0 : i32, i32
  }
}

</mosaic_0001>

<llo_original>
// kernel: tpu_custom_call.1
$region0: #{tpu_custom_call.1}
  #allocation0 [shape = 'u32[]', space=smem, size = 0x4, offset = 0x4, fixed_abs, tag = 'smem constant byte address 0x4 - core index']
  #allocation1 [shape = 'u32[144,128]{1,0:T(1,128)}', space=vmem, size = 0x12000, scoped, tag = 'internal scratch']
  #allocation2 [shape = 'f32[8,512]{1,0:T(8,128)}', space=vmem, size = 0x4000, scoped, tag = 'scratch operand']
  #allocation3 [shape = 'f32[1,1]{1,0:T(1,128)S(6)}', space=smem, size = 0x200, scoped, tag = 'scoped memory for tpu_custom_call.1']
  %s0 = inlined_call_operand.<no memory space> [shape: f32[1,1], index: 0, kind: input, shape index: {}]
  %s1 = inlined_call_operand.hbm [shape: f32[8,512], index: 1, kind: input, shape index: {}]
  %s2 = inlined_call_operand.vmem [shape: f32[8,1], index: 2, kind: input, shape index: {}]
  %s3 = inlined_call_operand.hbm [shape: f32[16,8,512], index: 3, kind: input, shape index: {}]
  %s4 = inlined_call_operand.hbm [shape: f32[8,512], index: 4, kind: output, shape index: {}]
  %s5 = sld [smem:[#allocation0]]
  $region65: #{tpu_custom_call.1} parent=0
    _
  %s7 = ssub.s32 1, %s5
  %s8 = scalar_select 0, %s7, %s5
  %9 = sst [smem:[#allocation3]] %s0
  $region1: #{tpu_custom_call.1} parent=0
    #allocation4 [shape = 'u8[16384]{0}', space=vmem, size = 0x4000, scoped, tag = 'input window, operand 1, single buffered']
    #allocation5 [shape = 's32[2]{0}', space=sflag, size = 0x8, scoped, tag = 'scoped memory for tpu_custom_call.1']
    #allocation6 [shape = 's32[2]{0}', space=sflag, size = 0x8, scoped, tag = 'scoped memory for tpu_custom_call.1']
    #allocation7 [shape = 'u8[32768]{0}', space=vmem, size = 0x8000, scoped, tag = 'input window, operand 3']
    #allocation8 [shape = 's32[2]{0}', space=sflag, size = 0x8, scoped, tag = 'scoped memory for tpu_custom_call.1']
    #allocation9 [shape = 'u8[16384]{0}', space=vmem, size = 0x4000, scoped, tag = 'output window, operand 0, single buffered']
    %10 = vsyncpa [#allocation5], 0
    %11 = vsyncpa [#allocation8], 0
    %s12 = scalar_lea.sflag [#allocation8], 1
    %13 = vsyncpa %s12, 0
    %14 = vsyncpa [#allocation6], 0
    loop: start=0, step=1, limit=18
    $region2: #{tpu_custom_call.1} parent=1 // loop_pre_header
      _
    $region3: #{tpu_custom_call.1} parent=1 // loop_header
      %s16 = sphi 0, %s20
      %p17 = scmp.ge.s32.totalorder %s16, 18
      %s24 = sphi 0, %s24
      %s26 = sphi 0, %s24
      %s27 = sphi 0, %s26
      %s41 = sphi 0, %s27
      %s45 = sphi 0, %s45
      %s47 = sphi 0, %s45
      %s48 = sphi 0, %s47
      %s62 = sphi 0, %s48
      %s66 = sphi 0, %s66
      %s68 = sphi 0, %s66
      %s69 = sphi 0, %s68
      %s83 = sphi 0, %s69
      %s89 = sphi 0, %s91
      %s92 = sphi 0, %s89
      %s93 = sphi 0, %s92
      %s109 = sphi 0, %s93
      %s113 = sphi 0, %s113
      %s115 = sphi 0, %s113
      %s116 = sphi 0, %s115
      %s130 = sphi 0, %s116
    $region4: #{tpu_custom_call.1} parent=1 // loop_header_branch
      %19 = sbr.rel (%p17) target = $region8
    $region5: #{tpu_custom_call.1} parent=1 // loop_body
      %s21 = ssub.s32 %s16, 1
      %s22 = ssub.s32 %s16, 2
      %s23 = sadd.s32 %s16, 1
      %s25 = sadd.s32 %s24, 1
      %p28 = scmp.eq.s32.totalorder %s16, 15
      %p29 = scmp.ne.s32.totalorder %s24, %s26
      %p30 = scmp.eq.s32.totalorder %s16, 0
      %p31 = por %p29, %p30
      %p32 = scmp.ne.s32.totalorder %s24, %s26
      %p33 = scmp.eq.s32.totalorder %s21, 15
      %p34 = por %p32, %p33
      %p35 = scmp.ne.s32.totalorder %s26, %s27
      %p36 = scmp.eq.s32.totalorder %s21, 0
      %p37 = por %p35, %p36
      %p38 = scmp.ne.s32.totalorder %s26, %s27
      %p39 = scmp.eq.s32.totalorder %s22, 15
      %p40 = por %p38, %p39
      %p42 = scmp.ne.s32.totalorder %s27, %s41
      %p43 = scmp.eq.s32.totalorder %s22, 0
      %p44 = por %p42, %p43
      %s46 = sadd.s32 %s45, 1
      %p49 = scmp.eq.s32.totalorder %s16, 15
      %p50 = scmp.ne.s32.totalorder %s45, %s47
      %p51 = scmp.eq.s32.totalorder %s16, 0
      %p52 = por %p50, %p51
      %p53 = scmp.ne.s32.totalorder %s45, %s47
      %p54 = scmp.eq.s32.totalorder %s21, 15
      %p55 = por %p53, %p54
      %p56 = scmp.ne.s32.totalorder %s47, %s48
      %p57 = scmp.eq.s32.totalorder %s21, 0
      %p58 = por %p56, %p57
      %p59 = scmp.ne.s32.totalorder %s47, %s48
      %p60 = scmp.eq.s32.totalorder %s22, 15
      %p61 = por %p59, %p60
      %p63 = scmp.ne.s32.totalorder %s48, %s62
      %p64 = scmp.eq.s32.totalorder %s22, 0
      %p65 = por %p63, %p64
      %s67 = sadd.s32 %s66, 1
      %p70 = scmp.eq.s32.totalorder %s16, 15
      %p71 = scmp.ne.s32.totalorder %s66, %s68
      %p72 = scmp.eq.s32.totalorder %s16, 0
      %p73 = por %p71, %p72
      %p74 = scmp.ne.s32.totalorder %s66, %s68
      %p75 = scmp.eq.s32.totalorder %s21, 15
      %p76 = por %p74, %p75
      %p77 = scmp.ne.s32.totalorder %s68, %s69
      %p78 = scmp.eq.s32.totalorder %s21, 0
      %p79 = por %p77, %p78
      %p80 = scmp.ne.s32.totalorder %s68, %s69
      %p81 = scmp.eq.s32.totalorder %s22, 15
      %p82 = por %p80, %p81
      %p84 = scmp.ne.s32.totalorder %s69, %s83
      %p85 = scmp.eq.s32.totalorder %s22, 0
      %p86 = por %p84, %p85
      %s87 = ssub.s32 %s16, %s23
      %p88 = scmp.eq.s32.totalorder %s87, 0
      %s90 = sadd.s32 %s89, 1
      %s91 = scalar_select %p88, %s89, %s90
      %p94 = pneg %p88
      %p95 = scmp.eq.s32.totalorder %s16, 15
      %p96 = por %p94, %p95
      %p97 = scmp.ne.s32.totalorder %s89, %s92
      %p98 = scmp.eq.s32.totalorder %s16, 0
      %p99 = por %p97, %p98
      %p100 = scmp.ne.s32.totalorder %s89, %s92
      %p101 = scmp.eq.s32.totalorder %s21, 15
      %p102 = por %p100, %p101
      %p103 = scmp.ne.s32.totalorder %s92, %s93
      %p104 = scmp.eq.s32.totalorder %s21, 0
      %p105 = por %p103, %p104
      %p106 = scmp.ne.s32.totalorder %s92, %s93
      %p107 = scmp.eq.s32.totalorder %s22, 15
      %p108 = por %p106, %p107
      %p110 = scmp.ne.s32.totalorder %s93, %s109
      %p111 = scmp.eq.s32.totalorder %s22, 0
      %p112 = por %p110, %p111
      %s114 = sadd.s32 %s113, 1
      %p117 = scmp.eq.s32.totalorder %s16, 15
      %p118 = scmp.ne.s32.totalorder %s113, %s115
      %p119 = scmp.eq.s32.totalorder %s16, 0
      %p120 = por %p118, %p119
      %p121 = scmp.ne.s32.totalorder %s113, %s115
      %p122 = scmp.eq.s32.totalorder %s21, 15
      %p123 = por %p121, %p122
      %p124 = scmp.ne.s32.totalorder %s115, %s116
      %p125 = scmp.eq.s32.totalorder %s21, 0
      %p126 = por %p124, %p125
      %p127 = scmp.ne.s32.totalorder %s115, %s116
      %p128 = scmp.eq.s32.totalorder %s22, 15
      %p129 = por %p127, %p128
      %p131 = scmp.ne.s32.totalorder %s116, %s130
      %p132 = scmp.eq.s32.totalorder %s22, 0
      %p133 = por %p131, %p132
      %p134 = scmp.le.s32.totalorder 1, %s16
      %p135 = scmp.lt.s32.totalorder %s16, 17
      %p136 = pnand %p134, %p135
      %p137 = pneg %p136
      // Predicated region
      $region9: #{tpu_custom_call.1} parent=5 // pred_check
        _
      $region10: #{tpu_custom_call.1} parent=5 // pred_check_branch
        %139 = sbr.rel (%p136) target = $region12
      $region11: #{tpu_custom_call.1} parent=5 // pred_region
        %s140 = ssub.s32 %s16, 1
        // Predicated region
        $region13: #{tpu_custom_call.1} parent=11 // pred_check
          %p141 = pneg %p37
        $region14: #{tpu_custom_call.1} parent=11 // pred_check_branch
          %143 = sbr.rel (%p141) target = $region16
        $region15: #{tpu_custom_call.1} parent=11 // pred_region
          _
        $region16: #{tpu_custom_call.1} parent=11 // pred_fallthru
          _
        // Predicated region
        $region17: #{tpu_custom_call.1} parent=11 // pred_check
          %p144 = pneg %p58
        $region18: #{tpu_custom_call.1} parent=11 // pred_check_branch
          %146 = sbr.rel (%p144) target = $region20
        $region19: #{tpu_custom_call.1} parent=11 // pred_region
          %s148 = ssub.s32 512, 512
          %149 = vsyncadd [#allocation5], %s148
          %s151 = sshll.u32 [#allocation4], 4
          %s152 = int_to_ptr.vmem [resolvable:$true] %s151
          %154 = dma.hbm_to_vmem [thread:$0]  %s1, 512, %s152, [#allocation5]
        $region20: #{tpu_custom_call.1} parent=11 // pred_fallthru
          _
        // Predicated region
        $region21: #{tpu_custom_call.1} parent=11 // pred_check
          %p155 = pneg %p79
        $region22: #{tpu_custom_call.1} parent=11 // pred_check_branch
          %157 = sbr.rel (%p155) target = $region24
        $region23: #{tpu_custom_call.1} parent=11 // pred_region
          _
        $region24: #{tpu_custom_call.1} parent=11 // pred_fallthru
          _
      $region12: #{tpu_custom_call.1} parent=5 // pred_fallthru
        _
      %p158 = scmp.lt.s32.totalorder %s16, 16
      // Predicated region
      $region25: #{tpu_custom_call.1} parent=5 // pred_check
        %p159 = pneg %p158
      $region26: #{tpu_custom_call.1} parent=5 // pred_check_branch
        %161 = sbr.rel (%p159) target = $region28
      $region27: #{tpu_custom_call.1} parent=5 // pred_region
        // Predicated region
        $region29: #{tpu_custom_call.1} parent=27 // pred_check
          %p162 = pneg %p99
        $region30: #{tpu_custom_call.1} parent=27 // pred_check_branch
          %164 = sbr.rel (%p162) target = $region32
        $region31: #{tpu_custom_call.1} parent=27 // pred_region
          %s165 = sand.u32 %s89, 1
          %s166 = scalar_lea.sflag [#allocation8], %s165
          %s167 = sand.u32 %s89, 1
          %s168 = smul.addr %s167, 32
          %s169 = scalar_lea.vmem [#allocation7], %s168
          %s171 = ssub.s32 512, 512
          %172 = vsyncadd %s166, %s171
          %s173 = smul.addr %s16, 4
          %s174 = smul.addr %s173, 128
          %s175 = scalar_lea.hbm %s3, %s174
          %s177 = sshll.u32 %s169, 4
          %s178 = int_to_ptr.vmem [resolvable:$true] %s177
          %180 = dma.hbm_to_vmem [thread:$0]  %s175, 512, %s178, %s166
        $region32: #{tpu_custom_call.1} parent=27 // pred_fallthru
          _
      $region28: #{tpu_custom_call.1} parent=5 // pred_fallthru
        _
      %p181 = scmp.le.s32.totalorder 1, %s16
      %p182 = scmp.lt.s32.totalorder %s16, 17
      %p183 = pnand %p181, %p182
      %p184 = pneg %p183
      // Predicated region
      $region33: #{tpu_custom_call.1} parent=5 // pred_check
        _
      $region34: #{tpu_custom_call.1} parent=5 // pred_check_branch
        %186 = sbr.rel (%p183) target = $region36
      $region35: #{tpu_custom_call.1} parent=5 // pred_region
        %s187 = ssub.s32 %s16, 1
        // Predicated region
        $region37: #{tpu_custom_call.1} parent=35 // pred_check
          %p188 = pneg %p58
        $region38: #{tpu_custom_call.1} parent=35 // pred_check_branch
          %190 = sbr.rel (%p188) target = $region40
        $region39: #{tpu_custom_call.1} parent=35 // pred_region
          %191 = dma.done [#allocation5], 512
        $region40: #{tpu_custom_call.1} parent=35 // pred_fallthru
          _
        %s192 = sand.u32 %s92, 1
        %s193 = scalar_lea.sflag [#allocation8], %s192
        %s194 = sand.u32 %s92, 1
        %s195 = smul.addr %s194, 32
        %s196 = scalar_lea.vmem [#allocation7], %s195
        // Predicated region
        $region41: #{tpu_custom_call.1} parent=35 // pred_check
          %p197 = pneg %p105
        $region42: #{tpu_custom_call.1} parent=35 // pred_check_branch
          %199 = sbr.rel (%p197) target = $region44
        $region43: #{tpu_custom_call.1} parent=35 // pred_region
          %200 = dma.done %s193, 512
        $region44: #{tpu_custom_call.1} parent=35 // pred_fallthru
          _
        %p201 = pneg %p37
        %p202 = pneg %p34
        %p203 = pneg %p58
        %p204 = pneg %p55
        %p205 = pneg %p79
        %p206 = pneg %p76
        %s207 = sand.u32 %s92, 1
        %s208 = scalar_lea.sflag [#allocation8], %s207
        %s209 = sand.u32 %s92, 1
        %s210 = smul.addr %s209, 32
        %s211 = scalar_lea.vmem [#allocation7], %s210
        %p212 = pneg %p105
        %p213 = pneg %p102
        %p214 = pneg %p126
        %p215 = pneg %p123
        %p216 = scmp.eq.s32.totalorder %s21, 0
        // Predicated region
        $region45: #{tpu_custom_call.1} parent=35 // pred_check
          %p217 = pneg %p216
        $region46: #{tpu_custom_call.1} parent=35 // pred_check_branch
          %219 = sbr.rel (%p217) target = $region48
        $region47: #{tpu_custom_call.1} parent=35 // pred_region
          %v220 = vld [vmem:[#allocation4] sm:$0xff]
          %v221 = vld [vmem:[#allocation4 + $0x8] sm:$0xff]
          %v222 = vld [vmem:[#allocation4 + $0x10] sm:$0xff]
          %v223 = vld [vmem:[#allocation4 + $0x18] sm:$0xff]
          %224 = vst [vmem:[#allocation2] sm:$0xff] %v220
          %225 = vst [vmem:[#allocation2 + $0x8] sm:$0xff] %v221
          %226 = vst [vmem:[#allocation2 + $0x10] sm:$0xff] %v222
          %227 = vst [vmem:[#allocation2 + $0x18] sm:$0xff] %v223
        $region48: #{tpu_custom_call.1} parent=35 // pred_fallthru
          _
        %s228 = sld [smem:[#allocation3]]
        %s229 = scvt.s32.f32 %s21
        %s230 = smul.f32 %s229, 0.01
        %s231 = sadd.f32 %s228, %s230
        %s232 = smul.f32 %s231, 0.01
        %s233 = ssub.f32 1.0, %s232
        %v234 = vld [vmem:[#allocation2] sm:$0xff]
        %v235 = vld [vmem:[#allocation2 + $0x8] sm:$0xff]
        %v236 = vld [vmem:[#allocation2 + $0x10] sm:$0xff]
        %v237 = vld [vmem:[#allocation2 + $0x18] sm:$0xff]
        %v238 = vstv %s233
        %v239 = vmul.f32 %v234, %v238
        %v240 = vmul.f32 %v235, %v238
        %v241 = vmul.f32 %v236, %v238
        %v242 = vmul.f32 %v237, %v238
        %v243 = vld [vmem:[%s2] sm:$0xff]
        %v244 = vmul.f32 %v243, 0.1
        %v245 = vld [vmem:[%s196] sm:$0xff]
        %v246 = vld [vmem:[%s196 + $0x8] sm:$0xff]
        %v247 = vld [vmem:[%s196 + $0x10] sm:$0xff]
        %v248 = vld [vmem:[%s196 + $0x18] sm:$0xff]
        %250 = vset.pattern.permute.xlu0 0
        %251 = vperm.xlu0 %250, %v244
        %v252 = vpop.permute.xlu0 %251
        %v254 = vmul.f32 %v252, %v245
        %v255 = vmul.f32 %v252, %v246
        %v256 = vmul.f32 %v252, %v247
        %v257 = vmul.f32 %v252, %v248
        %v258 = vadd.f32 %v239, %v254
        %v259 = vadd.f32 %v240, %v255
        %v260 = vadd.f32 %v241, %v256
        %v261 = vadd.f32 %v242, %v257
        %262 = vst [vmem:[#allocation2] sm:$0xff] %v258
        %263 = vst [vmem:[#allocation2 + $0x8] sm:$0xff] %v259
        %264 = vst [vmem:[#allocation2 + $0x10] sm:$0xff] %v260
        %265 = vst [vmem:[#allocation2 + $0x18] sm:$0xff] %v261
        %p266 = scmp.eq.s32.totalorder %s21, 15
        // Predicated region
        $region49: #{tpu_custom_call.1} parent=35 // pred_check
          %p267 = pneg %p266
        $region50: #{tpu_custom_call.1} parent=35 // pred_check_branch
          %269 = sbr.rel (%p267) target = $region52
        $region51: #{tpu_custom_call.1} parent=35 // pred_region
          %v270 = vld [vmem:[#allocation2] sm:$0xff]
          %v271 = vld [vmem:[#allocation2 + $0x8] sm:$0xff]
          %v272 = vld [vmem:[#allocation2 + $0x10] sm:$0xff]
          %v273 = vld [vmem:[#allocation2 + $0x18] sm:$0xff]
          %274 = vst [vmem:[#allocation9] sm:$0xff] %v270
          %275 = vst [vmem:[#allocation9 + $0x8] sm:$0xff] %v271
          %276 = vst [vmem:[#allocation9 + $0x10] sm:$0xff] %v272
          %277 = vst [vmem:[#allocation9 + $0x18] sm:$0xff] %v273
        $region52: #{tpu_custom_call.1} parent=35 // pred_fallthru
          _
        // Predicated region
        $region53: #{tpu_custom_call.1} parent=35 // pred_check
          %p278 = pneg %p123
        $region54: #{tpu_custom_call.1} parent=35 // pred_check_branch
          %280 = sbr.rel (%p278) target = $region56
        $region55: #{tpu_custom_call.1} parent=35 // pred_region
          %s282 = ssub.s32 512, 512
          %283 = vsyncadd [#allocation6], %s282
          %s285 = sshll.u32 [#allocation9], 4
          %s286 = int_to_ptr.vmem [resolvable:$true] %s285
          %288 = dma.vmem_to_hbm [thread:$0]  %s286, 512, %s4, [#allocation6]
        $region56: #{tpu_custom_call.1} parent=35 // pred_fallthru
          _
        // Predicated region
        $region57: #{tpu_custom_call.1} parent=35 // pred_check
          %p289 = pneg %p123
        $region58: #{tpu_custom_call.1} parent=35 // pred_check_branch
          %291 = sbr.rel (%p289) target = $region60
        $region59: #{tpu_custom_call.1} parent=35 // pred_region
          %292 = dma.done [#allocation6], 512
        $region60: #{tpu_custom_call.1} parent=35 // pred_fallthru
          _
      $region36: #{tpu_custom_call.1} parent=5 // pred_fallthru
        _
      %p293 = scmp.le.s32.totalorder 2, %s16
      // Predicated region
      $region61: #{tpu_custom_call.1} parent=5 // pred_check
        %p294 = pneg %p293
      $region62: #{tpu_custom_call.1} parent=5 // pred_check_branch
        %296 = sbr.rel (%p294) target = $region64
      $region63: #{tpu_custom_call.1} parent=5 // pred_region
        %s297 = ssub.s32 %s16, 2
      $region64: #{tpu_custom_call.1} parent=5 // pred_fallthru
        _
    $region6: #{tpu_custom_call.1} parent=1 // loop_footer
      %s20 = sadd.s32 1, %s16
    $region7: #{tpu_custom_call.1} parent=1 // loop_footer_branch
      %15 = sbr.rel target = $region3
    $region8: #{tpu_custom_call.1} parent=1 // loop_exit
      _
    %298 = vsyncpa [#allocation5], 1
    %s299 = scalar_lea.sflag [#allocation5], 1
    %300 = vsyncpa %s299, 1
    %301 = vsyncpa [#allocation8], 1
    %s302 = scalar_lea.sflag [#allocation8], 1
    %303 = vsyncpa %s302, 1
    %304 = vsyncpa [#allocation6], 1
    %s305 = scalar_lea.sflag [#allocation6], 1
    %306 = vsyncpa %s305, 1

</llo_original>
